<compile_context>
chip_gen: v5e
topology: v5e:2x2
jax: 0.10.0
libtpu: 0.0.40
codegen_flags: <defaults>
</compile_context>

<pallas_src>
import functools

import jax
import jax.numpy as jnp
from jax.experimental import pallas as pl
from jax.experimental.pallas import tpu as pltpu


def _concat_conv_relu_kernel(a_ref, b_ref, w_ref, o_ref, x_ref):
    # a_ref: (C, tn)          equi features (channels on sublanes, spatial on lanes)
    # b_ref: (C_add, tn)      c2e features
    # w_ref: (C_out, C+C_add) full (unsplit) 1x1 conv weight
    # o_ref: (C_out, tn)      lane-dense output tile
    # x_ref: (C+C_add, tn)    VMEM scratch holding the packed (concatenated) stream
    C = a_ref.shape[0]
    x_ref[:C, :] = a_ref[...]
    x_ref[C:, :] = b_ref[...]
    # Single K=(C+C_add) MXU contraction.  Default matmul precision matches the
    # pure-JAX einsum reference below (bf16-pass decomposition on the MXU).
    acc = jnp.dot(w_ref[...], x_ref[...], preferred_element_type=jnp.float32)
    o_ref[...] = jnp.maximum(acc, 0.0).astype(o_ref.dtype)


def _round_up(x, m):
    return ((x + m - 1) // m) * m


@functools.partial(jax.jit, static_argnames=("tn_max",))
def concat_conv_relu(equi_feat, c2e_feat, weight, *, tn_max=65536):
    """Forward of Concat.

    equi_feat: (N, C, H, W)              float32 (NCHW, like PyTorch)
    c2e_feat:  (N, C_add, H, W)          float32
    weight:    (C, C + C_add, 1, 1)      1x1 conv weight, no bias (PyTorch OIHW)
    returns:   (N, C, H, W)
    """
    N, C, H, W = equi_feat.shape
    C_add = c2e_feat.shape[1]
    C_in = C + C_add
    C_out = weight.shape[0]
    HW = H * W

    # Free reshapes only -- no transpose, no padding, no extra HBM passes.
    a = equi_feat.reshape(N, C, HW)
    b = c2e_feat.reshape(N, C_add, HW)
    w = weight.reshape(C_out, C_in)          # unsplit weight, single K=C_in dot

    # ---- lane-tile selection -------------------------------------------------
    # Evenly partition HW into 128-aligned tiles no larger than tn_max.  A ragged
    # last block (HW not a multiple of 128) is masked by Pallas; each output
    # column depends only on its own input column, so padding is harmless.
    nblocks = max(1, pl.cdiv(HW, tn_max))
    if nblocks == 1:
        tn = HW                               # single full-extent block: always legal
    else:
        tn = _round_up(pl.cdiv(HW, nblocks), 128)

    # v7x has 2 TensorCores: make sure the 'parallel' grid has >= 2 steps.
    if N * pl.cdiv(HW, tn) < 2 and HW > 128:
        tn = _round_up(pl.cdiv(HW, 2), 128)

    grid = (N, pl.cdiv(HW, tn))

    cost = pl.CostEstimate(
        flops=2 * C_out * C_in * N * HW,
        transcendentals=0,
        bytes_accessed=(C + C_add + C_out) * N * HW * 4,
    )

    out = pl.pallas_call(
        _concat_conv_relu_kernel,
        out_shape=jax.ShapeDtypeStruct((N, C_out, HW), equi_feat.dtype),
        grid_spec=pltpu.PrefetchScalarGridSpec(
            num_scalar_prefetch=0,
            grid=grid,
            in_specs=[
                pl.BlockSpec((pl.Squeezed(), C, tn), lambda n, j: (n, 0, j)),
                pl.BlockSpec((pl.Squeezed(), C_add, tn), lambda n, j: (n, 0, j)),
                pl.BlockSpec((C_out, C_in), lambda n, j: (0, 0)),
            ],
            out_specs=pl.BlockSpec(
                (pl.Squeezed(), C_out, tn), lambda n, j: (n, 0, j)),
            scratch_shapes=[pltpu.VMEM((C_in, tn), jnp.float32)],
        ),
        compiler_params=pltpu.CompilerParams(
            dimension_semantics=("parallel", "parallel"),
            vmem_limit_bytes=32 * 1024 * 1024,
        ),
        cost_estimate=cost,
    )(a, b, w)

    return out.reshape(N, C_out, H, W)


if __name__ == "__main__":
    key = jax.random.PRNGKey(0)
    k_equi, k_c2e, k_w = jax.random.split(key, 3)

    # Small shapes consistent with the module: channels=4, add_channels=4
    N, C, C_add, H, W = 2, 4, 4, 16, 16

    equi_feat = jax.random.normal(k_equi, (N, C, H, W), dtype=jnp.float32)
    c2e_feat = jax.random.normal(k_c2e, (N, C_add, H, W), dtype=jnp.float32)
    # Deterministic Conv2d weight init (kaiming-like scale), shape (C_out, C_in, 1, 1)
    fan_in = C + C_add
    weight = jax.random.normal(k_w, (C, C + C_add, 1, 1), dtype=jnp.float32) * (
        1.0 / jnp.sqrt(fan_in))

    out = concat_conv_relu(equi_feat, c2e_feat, weight)
    out = jax.block_until_ready(out)

    # Pure-JAX reference (concat -> 1x1 conv -> relu) for sanity.
    x = jnp.concatenate([equi_feat, c2e_feat], axis=1)          # (N, C+C_add, H, W)
    w2d = weight.reshape(C, C + C_add)                          # (C_out, C_in)
    ref = jnp.einsum("nchw,oc->nohw", x, w2d)
    ref = jnp.maximum(ref, 0.0)
    assert out.shape == (N, C, H, W)
    assert jnp.allclose(out, ref, atol=1e-5, rtol=1e-5), "mismatch vs reference"

    print("KERNEL_OK")
</pallas_src>

<mosaic_0001>
module attributes {stable_mosaic.version = 11 : i64} {
  func.func @_concat_conv_relu_kernel(%arg0: i32, %arg1: i32, %arg2: memref<1x4x256xf32, #tpu.memory_space<vmem>>, %arg3: memref<1x4x256xf32, #tpu.memory_space<vmem>>, %arg4: memref<4x8xf32, #tpu.memory_space<vmem>>, %arg5: memref<1x4x256xf32, #tpu.memory_space<vmem>>, %arg6: memref<8x256xf32, #tpu.memory_space<vmem>>) attributes {dimension_semantics = [#tpu.dimension_semantics<parallel>, #tpu.dimension_semantics<parallel>], iteration_bounds = array<i64: 2, 1>, scalar_prefetch = 0 : i64, scratch_operands = 1 : i64, tpu.core_type = #tpu.core_type<tc>, window_params = [{transform_indices = @transform_0, window_bounds = array<i64: 1, 4, 256>}, {transform_indices = @transform_1, window_bounds = array<i64: 1, 4, 256>}, {pipeline_mode = #tpu.pipeline_mode<synchronous>, transform_indices = @transform_2, window_bounds = array<i64: 4, 8>}, {transform_indices = @transform_3, window_bounds = array<i64: 1, 4, 256>}]} {
    %c0 = arith.constant 0 : index
    %c0_0 = arith.constant 0 : index
    %c0_1 = arith.constant 0 : index
    %0 = vector.load %arg2[%c0, %c0_0, %c0_1] : memref<1x4x256xf32, #tpu.memory_space<vmem>>, vector<1x4x256xf32>
    %1 = vector.shape_cast %0 : vector<1x4x256xf32> to vector<4x256xf32>
    %c0_2 = arith.constant 0 : index
    %c0_3 = arith.constant 0 : index
    %2 = vector.load %arg6[%c0_2, %c0_3] : memref<8x256xf32, #tpu.memory_space<vmem>>, vector<4x256xf32>
    tpu.vector_store %arg6[%c0_2, %c0_3], %1 {strides = array<i32>} : memref<8x256xf32, #tpu.memory_space<vmem>>, vector<4x256xf32>,
    %c0_4 = arith.constant 0 : index
    %c0_5 = arith.constant 0 : index
    %c0_6 = arith.constant 0 : index
    %3 = vector.load %arg3[%c0_4, %c0_5, %c0_6] : memref<1x4x256xf32, #tpu.memory_space<vmem>>, vector<1x4x256xf32>
    %4 = vector.shape_cast %3 : vector<1x4x256xf32> to vector<4x256xf32>
    %c4 = arith.constant 4 : index
    %c0_7 = arith.constant 0 : index
    %5 = vector.load %arg6[%c4, %c0_7] : memref<8x256xf32, #tpu.memory_space<vmem>>, vector<4x256xf32>
    tpu.vector_store %arg6[%c4, %c0_7], %4 {strides = array<i32>} : memref<8x256xf32, #tpu.memory_space<vmem>>, vector<4x256xf32>,
    %c0_8 = arith.constant 0 : index
    %c0_9 = arith.constant 0 : index
    %6 = vector.load %arg4[%c0_8, %c0_9] : memref<4x8xf32, #tpu.memory_space<vmem>>, vector<4x8xf32>
    %c0_10 = arith.constant 0 : index
    %c0_11 = arith.constant 0 : index
    %7 = vector.load %arg6[%c0_10, %c0_11] : memref<8x256xf32, #tpu.memory_space<vmem>>, vector<8x256xf32>
    %cst = arith.constant dense<0.000000e+00> : vector<4x256xf32>
    %8 = tpu.matmul %6, %7, %cst {dimension_numbers = #tpu.dot_dimension_numbers<[1], [0], [0], [1], [0, 0, 1, 1], [], []>} : vector<4x8xf32>, vector<8x256xf32>, vector<4x256xf32> -> vector<4x256xf32>
    %cst_12 = arith.constant 0.000000e+00 : f32
    %9 = vector.broadcast %cst_12 : f32 to vector<4x256xf32>
    %10 = arith.maximumf %8, %9 : vector<4x256xf32>
    %c0_13 = arith.constant 0 : index
    %c0_14 = arith.constant 0 : index
    %c0_15 = arith.constant 0 : index
    %11 = vector.load %arg5[%c0_13, %c0_14, %c0_15] : memref<1x4x256xf32, #tpu.memory_space<vmem>>, vector<1x4x256xf32>
    %12 = vector.shape_cast %11 : vector<1x4x256xf32> to vector<4x256xf32>
    %13 = vector.shape_cast %10 : vector<4x256xf32> to vector<1x4x256xf32>
    tpu.vector_store %arg5[%c0_13, %c0_14, %c0_15], %13 {strides = array<i32>} : memref<1x4x256xf32, #tpu.memory_space<vmem>>, vector<1x4x256xf32>,
    return
  }
  func.func @transform_0(%arg0: i32, %arg1: i32) -> (i32, i32, i32) {
    %c0_i32 = arith.constant 0 : i32
    %c0_i32_0 = arith.constant 0 : i32
    return %arg0, %c0_i32, %arg1 : i32, i32, i32
  }
  func.func @transform_1(%arg0: i32, %arg1: i32) -> (i32, i32, i32) {
    %c0_i32 = arith.constant 0 : i32
    %c0_i32_0 = arith.constant 0 : i32
    return %arg0, %c0_i32, %arg1 : i32, i32, i32
  }
  func.func @transform_2(%arg0: i32, %arg1: i32) -> (i32, i32) {
    %c0_i32 = arith.constant 0 : i32
    %c0_i32_0 = arith.constant 0 : i32
    %c0_i32_1 = arith.constant 0 : i32
    return %c0_i32, %c0_i32_0 : i32, i32
  }
  func.func @transform_3(%arg0: i32, %arg1: i32) -> (i32, i32, i32) {
    %c0_i32 = arith.constant 0 : i32
    %c0_i32_0 = arith.constant 0 : i32
    return %arg0, %c0_i32, %arg1 : i32, i32, i32
  }
}

</mosaic_0001>

<llo_original>
// kernel: concat_conv_relu.1
$region0: #{concat_conv_relu.1}
  #allocation0 [shape = 'u32[]', space=smem, size = 0x4, offset = 0x4, fixed_abs, tag = 'smem constant byte address 0x4 - core index']
  #allocation1 [shape = 'u32[72,128]{1,0:T(1,128)}', space=vmem, size = 0x9000, scoped, tag = 'internal scratch']
  #allocation2 [shape = 'f32[8,256]{1,0:T(8,128)}', space=vmem, size = 0x2000, scoped, tag = 'scratch operand']
  %s0 = inlined_call_operand.vmem [shape: f32[2,4,256], index: 0, kind: input, shape index: {}]
  %s1 = inlined_call_operand.vmem [shape: f32[2,4,256], index: 1, kind: input, shape index: {}]
  %s2 = inlined_call_operand.vmem [shape: f32[4,8], index: 2, kind: input, shape index: {}]
  %s3 = inlined_call_operand.vmem [shape: f32[2,4,256], index: 3, kind: output, shape index: {}]
  %s4 = sld [smem:[#allocation0]]
  $region45: #{concat_conv_relu.1} parent=0
    _
  %s6 = ssub.s32 1, %s4
  %s7 = scalar_select 0, %s6, %s4
  loop: start=0, step=1, limit=4
  $region2: #{concat_conv_relu.1} parent=0 // loop_pre_header
    _
  $region3: #{concat_conv_relu.1} parent=0 // loop_header
    %s9 = sphi 0, %s13
    %p10 = scmp.ge.s32.totalorder %s9, 4
    %s16 = sphi 0, %s28
    %s17 = sphi 0, %s24
    %s18 = sphi 0, %s16
    %s19 = sphi 0, %s17
    %s20 = sphi 0, %s18
    %s21 = sphi 0, %s19
    %s33 = sphi 0, %s35
    %s36 = sphi 0, %s33
    %s37 = sphi 0, %s36
    %s53 = sphi 0, %s37
    %s61 = sphi 0, %s63
    %s64 = sphi 0, %s61
    %s65 = sphi 0, %s64
    %s81 = sphi 0, %s65
    %s85 = sphi 0, %s85
    %s87 = sphi 0, %s85
    %s88 = sphi 0, %s87
    %s102 = sphi 0, %s88
    %s110 = sphi 0, %s112
    %s113 = sphi 0, %s110
    %s114 = sphi 0, %s113
    %s130 = sphi 0, %s114
  $region4: #{concat_conv_relu.1} parent=0 // loop_header_branch
    %12 = sbr.rel (%p10) target = $region8
  $region5: #{concat_conv_relu.1} parent=0 // loop_body
    %s14 = ssub.s32 %s9, 1
    %s15 = ssub.s32 %s9, 2
    %s22 = sadd.s32 1, %s17
    %p23 = scmp.ge.s32.totalorder %s22, 1
    %s24 = scalar_select %p23, 0, %s22
    %s25 = sadd.s32 1, %s16
    %s26 = scalar_select %p23, %s25, %s16
    %p27 = scmp.ge.s32.totalorder %s26, 2
    %s28 = scalar_select %p27, 0, %s26
    %s29 = ssub.s32 %s16, %s28
    %s30 = ssub.s32 %s17, %s24
    %s31 = sor.u32 %s29, %s30
    %p32 = scmp.eq.s32.totalorder %s31, 0
    %s34 = sadd.s32 %s33, 1
    %s35 = scalar_select %p32, %s33, %s34
    %p38 = pneg %p32
    %p39 = scmp.eq.s32.totalorder %s9, 1
    %p40 = por %p38, %p39
    %p41 = scmp.ne.s32.totalorder %s33, %s36
    %p42 = scmp.eq.s32.totalorder %s9, 0
    %p43 = por %p41, %p42
    %p44 = scmp.ne.s32.totalorder %s33, %s36
    %p45 = scmp.eq.s32.totalorder %s14, 1
    %p46 = por %p44, %p45
    %p47 = scmp.ne.s32.totalorder %s36, %s37
    %p48 = scmp.eq.s32.totalorder %s14, 0
    %p49 = por %p47, %p48
    %p50 = scmp.ne.s32.totalorder %s36, %s37
    %p51 = scmp.eq.s32.totalorder %s15, 1
    %p52 = por %p50, %p51
    %p54 = scmp.ne.s32.totalorder %s37, %s53
    %p55 = scmp.eq.s32.totalorder %s15, 0
    %p56 = por %p54, %p55
    %s57 = ssub.s32 %s16, %s28
    %s58 = ssub.s32 %s17, %s24
    %s59 = sor.u32 %s57, %s58
    %p60 = scmp.eq.s32.totalorder %s59, 0
    %s62 = sadd.s32 %s61, 1
    %s63 = scalar_select %p60, %s61, %s62
    %p66 = pneg %p60
    %p67 = scmp.eq.s32.totalorder %s9, 1
    %p68 = por %p66, %p67
    %p69 = scmp.ne.s32.totalorder %s61, %s64
    %p70 = scmp.eq.s32.totalorder %s9, 0
    %p71 = por %p69, %p70
    %p72 = scmp.ne.s32.totalorder %s61, %s64
    %p73 = scmp.eq.s32.totalorder %s14, 1
    %p74 = por %p72, %p73
    %p75 = scmp.ne.s32.totalorder %s64, %s65
    %p76 = scmp.eq.s32.totalorder %s14, 0
    %p77 = por %p75, %p76
    %p78 = scmp.ne.s32.totalorder %s64, %s65
    %p79 = scmp.eq.s32.totalorder %s15, 1
    %p80 = por %p78, %p79
    %p82 = scmp.ne.s32.totalorder %s65, %s81
    %p83 = scmp.eq.s32.totalorder %s15, 0
    %p84 = por %p82, %p83
    %s86 = sadd.s32 %s85, 1
    %p89 = scmp.eq.s32.totalorder %s9, 1
    %p90 = scmp.ne.s32.totalorder %s85, %s87
    %p91 = scmp.eq.s32.totalorder %s9, 0
    %p92 = por %p90, %p91
    %p93 = scmp.ne.s32.totalorder %s85, %s87
    %p94 = scmp.eq.s32.totalorder %s14, 1
    %p95 = por %p93, %p94
    %p96 = scmp.ne.s32.totalorder %s87, %s88
    %p97 = scmp.eq.s32.totalorder %s14, 0
    %p98 = por %p96, %p97
    %p99 = scmp.ne.s32.totalorder %s87, %s88
    %p100 = scmp.eq.s32.totalorder %s15, 1
    %p101 = por %p99, %p100
    %p103 = scmp.ne.s32.totalorder %s88, %s102
    %p104 = scmp.eq.s32.totalorder %s15, 0
    %p105 = por %p103, %p104
    %s106 = ssub.s32 %s16, %s28
    %s107 = ssub.s32 %s17, %s24
    %s108 = sor.u32 %s106, %s107
    %p109 = scmp.eq.s32.totalorder %s108, 0
    %s111 = sadd.s32 %s110, 1
    %s112 = scalar_select %p109, %s110, %s111
    %p115 = pneg %p109
    %p116 = scmp.eq.s32.totalorder %s9, 1
    %p117 = por %p115, %p116
    %p118 = scmp.ne.s32.totalorder %s110, %s113
    %p119 = scmp.eq.s32.totalorder %s9, 0
    %p120 = por %p118, %p119
    %p121 = scmp.ne.s32.totalorder %s110, %s113
    %p122 = scmp.eq.s32.totalorder %s14, 1
    %p123 = por %p121, %p122
    %p124 = scmp.ne.s32.totalorder %s113, %s114
    %p125 = scmp.eq.s32.totalorder %s14, 0
    %p126 = por %p124, %p125
    %p127 = scmp.ne.s32.totalorder %s113, %s114
    %p128 = scmp.eq.s32.totalorder %s15, 1
    %p129 = por %p127, %p128
    %p131 = scmp.ne.s32.totalorder %s114, %s130
    %p132 = scmp.eq.s32.totalorder %s15, 0
    %p133 = por %p131, %p132
    %p134 = scmp.le.s32.totalorder 1, %s9
    %p135 = scmp.lt.s32.totalorder %s9, 3
    %p136 = pnand %p134, %p135
    %p137 = pneg %p136
    // Predicated region
    $region9: #{concat_conv_relu.1} parent=5 // pred_check
      _
    $region10: #{concat_conv_relu.1} parent=5 // pred_check_branch
      %139 = sbr.rel (%p136) target = $region12
    $region11: #{concat_conv_relu.1} parent=5 // pred_region
      %s140 = ssub.s32 %s9, 1
      // Predicated region
      $region13: #{concat_conv_relu.1} parent=11 // pred_check
        %p141 = pneg %p98
      $region14: #{concat_conv_relu.1} parent=11 // pred_check_branch
        %143 = sbr.rel (%p141) target = $region16
      $region15: #{concat_conv_relu.1} parent=11 // pred_region
        _
      $region16: #{concat_conv_relu.1} parent=11 // pred_fallthru
        _
    $region12: #{concat_conv_relu.1} parent=5 // pred_fallthru
      _
    %p144 = scmp.lt.s32.totalorder %s9, 2
    // Predicated region
    $region17: #{concat_conv_relu.1} parent=5 // pred_check
      %p145 = pneg %p144
    $region18: #{concat_conv_relu.1} parent=5 // pred_check_branch
      %147 = sbr.rel (%p145) target = $region20
    $region19: #{concat_conv_relu.1} parent=5 // pred_region
      // Predicated region
      $region21: #{concat_conv_relu.1} parent=19 // pred_check
        %p148 = pneg %p43
      $region22: #{concat_conv_relu.1} parent=19 // pred_check_branch
        %150 = sbr.rel (%p148) target = $region24
      $region23: #{concat_conv_relu.1} parent=19 // pred_region
        %s151 = smul.u32 2, %s17
        %p152 = scmp.lt.s32.totalorder %s16, 1
        %s153 = scalar_select %p152, %s16, 1
        %p154 = scmp.lt.s32.totalorder %s151, 1
        %s155 = scalar_select %p154, %s151, 1
        %s156 = smul.addr %s153, 2
        %s157 = sadd.s32 %s155, %s156
        %s158 = smul.addr %s157, 4
        %s159 = scalar_lea.vmem %s0, %s158
        %s160 = smul.u32 2, %s17
      $region24: #{concat_conv_relu.1} parent=19 // pred_fallthru
        _
      // Predicated region
      $region25: #{concat_conv_relu.1} parent=19 // pred_check
        %p161 = pneg %p71
      $region26: #{concat_conv_relu.1} parent=19 // pred_check_branch
        %163 = sbr.rel (%p161) target = $region28
      $region27: #{concat_conv_relu.1} parent=19 // pred_region
        %s164 = smul.u32 2, %s17
        %p165 = scmp.lt.s32.totalorder %s16, 1
        %s166 = scalar_select %p165, %s16, 1
        %p167 = scmp.lt.s32.totalorder %s164, 1
        %s168 = scalar_select %p167, %s164, 1
        %s169 = smul.addr %s166, 2
        %s170 = sadd.s32 %s168, %s169
        %s171 = smul.addr %s170, 4
        %s172 = scalar_lea.vmem %s1, %s171
        %s173 = smul.u32 2, %s17
      $region28: #{concat_conv_relu.1} parent=19 // pred_fallthru
        _
    $region20: #{concat_conv_relu.1} parent=5 // pred_fallthru
      _
    %p174 = scmp.le.s32.totalorder 1, %s9
    %p175 = scmp.lt.s32.totalorder %s9, 3
    %p176 = pnand %p174, %p175
    %p177 = pneg %p176
    // Predicated region
    $region29: #{concat_conv_relu.1} parent=5 // pred_check
      _
    $region30: #{concat_conv_relu.1} parent=5 // pred_check_branch
      %179 = sbr.rel (%p176) target = $region32
    $region31: #{concat_conv_relu.1} parent=5 // pred_region
      %s180 = ssub.s32 %s9, 1
      %s181 = smul.u32 2, %s19
      %p182 = scmp.lt.s32.totalorder %s18, 1
      %s183 = scalar_select %p182, %s18, 1
      %p184 = scmp.lt.s32.totalorder %s181, 1
      %s185 = scalar_select %p184, %s181, 1
      %s186 = smul.addr %s183, 2
      %s187 = sadd.s32 %s185, %s186
      %s188 = smul.addr %s187, 4
      %s189 = scalar_lea.vmem %s0, %s188
      %p190 = pneg %p49
      %p191 = pneg %p46
      %s192 = smul.u32 2, %s19
      %p193 = scmp.lt.s32.totalorder %s18, 1
      %s194 = scalar_select %p193, %s18, 1
      %p195 = scmp.lt.s32.totalorder %s192, 1
      %s196 = scalar_select %p195, %s192, 1
      %s197 = smul.addr %s194, 2
      %s198 = sadd.s32 %s196, %s197
      %s199 = smul.addr %s198, 4
      %s200 = scalar_lea.vmem %s1, %s199
      %p201 = pneg %p77
      %p202 = pneg %p74
      %p203 = pneg %p98
      %p204 = pneg %p95
      %p205 = pneg %p126
      %p206 = pneg %p123
      %s207 = smul.u32 2, %s19
      %p208 = scmp.lt.s32.totalorder %s18, 1
      %s209 = scalar_select %p208, %s18, 1
      %p210 = scmp.lt.s32.totalorder %s207, 1
      %s211 = scalar_select %p210, %s207, 1
      %s212 = smul.addr %s209, 2
      %s213 = sadd.s32 %s211, %s212
      %s214 = smul.addr %s213, 4
      %s215 = scalar_lea.vmem %s3, %s214
      %s216 = smul.u32 2, %s19
      %p217 = scmp.lt.s32.totalorder %s18, 1
      %s218 = scalar_select %p217, %s18, 1
      %p219 = scmp.lt.s32.totalorder %s216, 1
      %s220 = scalar_select %p219, %s216, 1
      %s221 = smul.addr %s218, 2
      %s222 = sadd.s32 %s220, %s221
      %s223 = smul.addr %s222, 4
      %s224 = scalar_lea.vmem %s0, %s223
      %s225 = smul.u32 2, %s19
      %s226 = smul.u32 2, %s19
      %p227 = scmp.lt.s32.totalorder %s18, 1
      %s228 = scalar_select %p227, %s18, 1
      %p229 = scmp.lt.s32.totalorder %s226, 1
      %s230 = scalar_select %p229, %s226, 1
      %s231 = smul.addr %s228, 2
      %s232 = sadd.s32 %s230, %s231
      %s233 = smul.addr %s232, 4
      %s234 = scalar_lea.vmem %s1, %s233
      %s235 = smul.u32 2, %s19
      %s236 = smul.u32 2, %s19
      %p237 = scmp.lt.s32.totalorder %s18, 1
      %s238 = scalar_select %p237, %s18, 1
      %p239 = scmp.lt.s32.totalorder %s236, 1
      %s240 = scalar_select %p239, %s236, 1
      %s241 = smul.addr %s238, 2
      %s242 = sadd.s32 %s240, %s241
      %s243 = smul.addr %s242, 4
      %s244 = scalar_lea.vmem %s3, %s243
      %s245 = smul.u32 2, %s19
      %v246 = vld [vmem:[%s224] sm:$0xff]
      %248 = vst [vmem:[#allocation1] ss:$2 sm:$0xff] %v246
      %v249 = vld.sshfl [vmem:[#allocation1] sm:$0xff pattern:$0x75316420]
      %v250 = vld.sshfl [vmem:[#allocation1 + $0x8] sm:$0xff pattern:$0x75316420]
      %253 = vst [vmem:[#allocation2] sm:$0xf] %v249
      %254 = vst [vmem:[#allocation2 + $0x8] sm:$0xf] %v250
      %v255 = vld [vmem:[%s234] sm:$0xff]
      %s257 = scalar_lea.vmem [#allocation1], 1
      %258 = vst [vmem:[%s257] ss:$2 sm:$0xff] %v255
      %v259 = vld.sshfl [vmem:[#allocation1] sm:$0xff pattern:$0x75316420]
      %v260 = vld.sshfl [vmem:[#allocation1 + $0x8] sm:$0xff pattern:$0x75316420]
      %263 = vst [vmem:[#allocation2] sm:$0xf0] %v259
      %264 = vst [vmem:[#allocation2 + $0x8] sm:$0xf0] %v260
      %v265 = vld [vmem:[%s2] sm:$0xf]
      %v266 = vld [vmem:[#allocation2] sm:$0xff]
      %v267 = vld [vmem:[#allocation2 + $0x8] sm:$0xff]
      %vm268 = vcmask 64512
      %v270 = vsel %vm268, %v265, 0
      %272 = vmatpush.msra.mxu0 0.0
      %273 = vmatpush.msra.mxu0 0.0
      %274 = vmatpush.msra.mxu0 0.0
      %275 = vmatpush.msra.mxu0 0.0
      %276 = vmatpush.msra.mxu0 0.0
      %277 = vmatpush.msra.mxu0 0.0
      %278 = vmatpush.msra.mxu0 0.0
      %279 = vmatpush.msra.mxu0 0.0
      %280 = vmatpush.msra.mxu0 0.0
      %281 = vmatpush.msra.mxu0 0.0
      %282 = vmatpush.msra.mxu0 0.0
      %283 = vmatpush.msra.mxu0 0.0
      %284 = vmatpush.msra.mxu0 0.0
      %285 = vmatpush.msra.mxu0 0.0
      %286 = vmatpush.msra.mxu0 0.0
      %287 = vmatpush.msra.mxu0 %v266
      %288 = vmatmul.f32.gmra.mxu0 %v270
      %v289 = vpop.f32.mrf.mxu0
      %v290 = vadd.f32 0.0, %v289
      %291 = vdwg.mxu0
      %292 = vmatpush.msra.mxu0 0.0
      %293 = vmatpush.msra.mxu0 0.0
      %294 = vmatpush.msra.mxu0 0.0
      %295 = vmatpush.msra.mxu0 0.0
      %296 = vmatpush.msra.mxu0 0.0
      %297 = vmatpush.msra.mxu0 0.0
      %298 = vmatpush.msra.mxu0 0.0
      %299 = vmatpush.msra.mxu0 0.0
      %300 = vmatpush.msra.mxu0 0.0
      %301 = vmatpush.msra.mxu0 0.0
      %302 = vmatpush.msra.mxu0 0.0
      %303 = vmatpush.msra.mxu0 0.0
      %304 = vmatpush.msra.mxu0 0.0
      %305 = vmatpush.msra.mxu0 0.0
      %306 = vmatpush.msra.mxu0 0.0
      %307 = vmatpush.msra.mxu0 %v267
      %308 = vmatmul.f32.gmra.mxu0 %v270
      %v309 = vpop.f32.mrf.mxu0
      %v310 = vadd.f32 0.0, %v309
      %311 = vdwg.mxu0
      %v312 = vmax.f32 %v290, 0.0
      %v313 = vmax.f32 %v310, 0.0
      %v316 = vrot.slane %v313, 4
      %vm317 = vcmask 1043456
      %v318 = vsel %vm317, %v312, %v316
      %320 = vst [vmem:[%s244] sm:$0xff] %v318
      %s321 = smul.u32 2, %s19
      %p322 = scmp.lt.s32.totalorder %s18, 1
      %s323 = scalar_select %p322, %s18, 1
      %p324 = scmp.lt.s32.totalorder %s321, 1
      %s325 = scalar_select %p324, %s321, 1
      %s326 = smul.addr %s323, 2
      %s327 = sadd.s32 %s325, %s326
      %s328 = smul.addr %s327, 4
      %s329 = scalar_lea.vmem %s3, %s328
      // Predicated region
      $region33: #{concat_conv_relu.1} parent=31 // pred_check
        %p330 = pneg %p123
      $region34: #{concat_conv_relu.1} parent=31 // pred_check_branch
        %332 = sbr.rel (%p330) target = $region36
      $region35: #{concat_conv_relu.1} parent=31 // pred_region
        %s333 = smul.u32 2, %s19
      $region36: #{concat_conv_relu.1} parent=31 // pred_fallthru
        _
    $region32: #{concat_conv_relu.1} parent=5 // pred_fallthru
      _
    %p334 = scmp.le.s32.totalorder 2, %s9
    // Predicated region
    $region37: #{concat_conv_relu.1} parent=5 // pred_check
      %p335 = pneg %p334
    $region38: #{concat_conv_relu.1} parent=5 // pred_check_branch
      %337 = sbr.rel (%p335) target = $region40
    $region39: #{concat_conv_relu.1} parent=5 // pred_region
      %s338 = ssub.s32 %s9, 2
      // Predicated region
      $region41: #{concat_conv_relu.1} parent=39 // pred_check
        %p339 = pneg %p129
      $region42: #{concat_conv_relu.1} parent=39 // pred_check_branch
        %341 = sbr.rel (%p339) target = $region44
      $region43: #{concat_conv_relu.1} parent=39 // pred_region
        %s342 = smul.u32 2, %s21
        %p343 = scmp.lt.s32.totalorder %s20, 1
        %s344 = scalar_select %p343, %s20, 1
        %p345 = scmp.lt.s32.totalorder %s342, 1
        %s346 = scalar_select %p345, %s342, 1
        %s347 = smul.addr %s344, 2
        %s348 = sadd.s32 %s346, %s347
        %s349 = smul.addr %s348, 4
        %s350 = scalar_lea.vmem %s3, %s349
      $region44: #{concat_conv_relu.1} parent=39 // pred_fallthru
        _
    $region40: #{concat_conv_relu.1} parent=5 // pred_fallthru
      _
  $region6: #{concat_conv_relu.1} parent=0 // loop_footer
    %s13 = sadd.s32 1, %s9
  $region7: #{concat_conv_relu.1} parent=0 // loop_footer_branch
    %8 = sbr.rel target = $region3
  $region8: #{concat_conv_relu.1} parent=0 // loop_exit
    _

</llo_original>
